<compile_context>
chip_gen: v7x
topology: tpu7x:2x2x1
jax: 0.10.0
libtpu: 0.0.40
codegen_flags: <defaults>
</compile_context>

<pallas_src>
import functools

import jax
import jax.numpy as jnp
from jax import lax
from jax.experimental import pallas as pl
from jax.experimental.pallas import tpu as pltpu

EPS = 1e-6


def _round_up(x, m):
    return ((x + m - 1) // m) * m


def _cosine_mse_kernel(x_ref, lab_ref, out_ref, *, floor, ceil, dim, pairs, tile_p):
    i = pl.program_id(0)

    @pl.when(i == 0)
    def _init():
        out_ref[0, 0] = 0.0

    # x_ref block: (tile_p, 2*dim); first dim lanes are x1, last dim lanes are x2.
    x1 = x_ref[:, :dim].astype(jnp.float32)          # (tile_p, dim)
    x2 = x_ref[:, dim:].astype(jnp.float32)          # (tile_p, dim)
    lab = lab_ref[...].astype(jnp.float32)           # (tile_p, 1)

    dot = jnp.sum(x1 * x2, axis=-1, keepdims=True)   # (tile_p, 1)
    s1 = jnp.sum(x1 * x1, axis=-1, keepdims=True)
    s2 = jnp.sum(x2 * x2, axis=-1, keepdims=True)

    # cosine similarity with eps clamp on the norm product (nn.CosineSimilarity docs):
    #   dot / max(||x1||*||x2||, eps) == dot * rsqrt(max(s1*s2, eps^2))
    sim = dot * lax.rsqrt(jnp.maximum(s1 * s2, EPS * EPS))

    # scaling: x -> gap * 0.5*(x+1) + floor
    gap = ceil - floor
    sim = gap * (0.5 * (sim + 1.0)) + floor

    diff = sim - lab
    sq = diff * diff                                  # (tile_p, 1)

    # Mask rows beyond the true pair count (padded last tile / oversize block).
    row = lax.broadcasted_iota(jnp.int32, sq.shape, 0) + i * tile_p
    sq = jnp.where(row < pairs, sq, 0.0)

    out_ref[0, 0] += jnp.sum(sq)

    @pl.when(i == pl.num_programs(0) - 1)
    def _finalize():
        out_ref[0, 0] = out_ref[0, 0] * (1.0 / pairs)


def cosine_similarity_criterion(logits, labels, scale=(-1.0, 1.0), tile_p=None):
    """Pallas TPU implementation of CosineSimilarityCriterion.forward.

    logits: (bs, dim)  -- bs must be even; pairs are rows (2i, 2i+1)
    labels: (bs//2,)   -- target similarities
    returns: scalar float32 loss
    """
    bs, dim = logits.shape
    assert bs % 2 == 0, "batch size must be even (consecutive rows form pairs)"
    pairs = bs // 2
    floor, ceil = float(scale[0]), float(scale[1])

    # Free (contiguous/bitcast) reshapes -- no extra HBM pass.
    x_pairs = logits.reshape(pairs, 2 * dim)          # row i = [x1_i | x2_i]
    lab = labels.reshape(pairs, 1)

    itemsize = jnp.dtype(logits.dtype).itemsize
    row_bytes = 2 * dim * itemsize
    if tile_p is None:
        # ~4 MiB block -> 8 MiB double-buffered, safe on v5e/v6e/v7x scoped VMEM.
        max_block_bytes = 4 * 1024 * 1024
        tile_p = max(8, min(1024, max_block_bytes // max(row_bytes, 1)))
    tile_p = max(8, (tile_p // 8) * 8)                # sublane multiple
    tile_p = min(tile_p, _round_up(pairs, 8))
    grid = (pl.cdiv(pairs, tile_p),)

    kernel = functools.partial(
        _cosine_mse_kernel,
        floor=floor, ceil=ceil, dim=dim, pairs=pairs, tile_p=tile_p,
    )

    cost = pl.CostEstimate(
        flops=int(7 * pairs * dim),
        transcendentals=int(pairs),
        bytes_accessed=int(pairs * row_bytes
                           + pairs * jnp.dtype(labels.dtype).itemsize + 4),
    )

    out = pl.pallas_call(
        kernel,
        out_shape=jax.ShapeDtypeStruct((1, 1), jnp.float32),
        grid=grid,
        in_specs=[
            pl.BlockSpec((tile_p, 2 * dim), lambda i: (i, 0)),
            pl.BlockSpec((tile_p, 1), lambda i: (i, 0)),
        ],
        out_specs=pl.BlockSpec((1, 1), lambda i: (0, 0), memory_space=pltpu.SMEM),
        compiler_params=pltpu.CompilerParams(
            dimension_semantics=("arbitrary",),     # output block revisited (accumulator)
            vmem_limit_bytes=32 * 1024 * 1024,      # raise v5e's 16 MiB default
        ),
        cost_estimate=cost,
    )(x_pairs, lab)
    return out[0, 0]


def _reference(logits, labels, scale=(-1.0, 1.0)):
    bs, dim = logits.shape
    x = logits.reshape(bs // 2, 2, dim).astype(jnp.float32)
    x1, x2 = x[:, 0, :], x[:, 1, :]
    dot = jnp.sum(x1 * x2, axis=-1)
    n1 = jnp.sqrt(jnp.sum(x1 * x1, axis=-1))
    n2 = jnp.sqrt(jnp.sum(x2 * x2, axis=-1))
    sim = dot / jnp.maximum(n1 * n2, EPS)
    floor, ceil = scale
    gap = ceil - floor
    sim = gap * (0.5 * (sim + 1.0)) + floor
    return jnp.mean((sim - labels.astype(jnp.float32)) ** 2)


if __name__ == "__main__":
    key = jax.random.PRNGKey(0)
    k1, k2, k3, k4 = jax.random.split(key, 4)

    # --- test 1: toy shape (4 pairs, hidden=32), single tile ---
    bs, dim = 8, 32
    logits = jax.random.normal(k1, (bs, dim), dtype=jnp.float32)
    labels = jax.random.uniform(k2, (bs // 2,), dtype=jnp.float32,
                                minval=-1.0, maxval=1.0)
    loss = jax.block_until_ready(cosine_similarity_criterion(logits, labels))
    ref = _reference(logits, labels)
    assert jnp.allclose(loss, ref, atol=1e-5, rtol=1e-5), (loss, ref)

    # --- test 2: multi-tile grid with a partial (masked) last tile ---
    bs2, dim2 = 40, 128                    # 20 pairs, tile_p=8 -> grid of 3, last partial
    logits2 = jax.random.normal(k3, (bs2, dim2), dtype=jnp.float32)
    labels2 = jax.random.uniform(k4, (bs2 // 2,), dtype=jnp.float32,
                                 minval=-1.0, maxval=1.0)
    loss2 = jax.block_until_ready(
        cosine_similarity_criterion(logits2, labels2, tile_p=8))
    ref2 = _reference(logits2, labels2)
    assert jnp.allclose(loss2, ref2, atol=1e-5, rtol=1e-5), (loss2, ref2)

    print("KERNEL_OK")
</pallas_src>

<mosaic_0001>
module attributes {stable_mosaic.version = 11 : i64} {
  func.func @_cosine_mse_kernel(%arg0: i32, %arg1: memref<8x64xf32, #tpu.memory_space<vmem>>, %arg2: memref<8x1xf32, #tpu.memory_space<vmem>>, %arg3: memref<1x1xf32, #tpu.memory_space<smem>>) attributes {dimension_semantics = [#tpu.dimension_semantics<arbitrary>], iteration_bounds = array<i64: 1>, scalar_prefetch = 0 : i64, scratch_operands = 0 : i64, tpu.core_type = #tpu.core_type<tc>, window_params = [{transform_indices = @transform_0, window_bounds = array<i64: 8, 64>}, {transform_indices = @transform_1, window_bounds = array<i64: 8, 1>}, {transform_indices = @transform_2, window_bounds = array<i64: 1, 1>}]} {
    %c0_i32 = arith.constant 0 : i32
    %0 = arith.cmpi eq, %arg0, %c0_i32 : i32
    %1 = arith.extui %0 : i1 to i32
    %c0_i32_0 = arith.constant 0 : i32
    %2 = arith.cmpi ne, %1, %c0_i32_0 : i32
    scf.if %2 {
      %cst_20 = arith.constant 0.000000e+00 : f32
      %c0_21 = arith.constant 0 : index
      %c0_22 = arith.constant 0 : index
      %48 = memref.load %arg3[%c0_21, %c0_22] : memref<1x1xf32, #tpu.memory_space<smem>>
      memref.store %cst_20, %arg3[%c0_21, %c0_22] : memref<1x1xf32, #tpu.memory_space<smem>>
    } else {
    }
    %c0 = arith.constant 0 : index
    %c0_1 = arith.constant 0 : index
    %3 = vector.load %arg1[%c0, %c0_1] : memref<8x64xf32, #tpu.memory_space<vmem>>, vector<8x32xf32>
    %c0_2 = arith.constant 0 : index
    %c32 = arith.constant 32 : index
    %4 = vector.load %arg1[%c0_2, %c32] : memref<8x64xf32, #tpu.memory_space<vmem>>, vector<8x32xf32>
    %c0_3 = arith.constant 0 : index
    %c0_4 = arith.constant 0 : index
    %5 = vector.load %arg2[%c0_3, %c0_4] : memref<8x1xf32, #tpu.memory_space<vmem>>, vector<8x1xf32>
    %6 = arith.mulf %3, %4 : vector<8x32xf32>
    %cst = arith.constant dense<0.000000e+00> : vector<8xf32>
    %7 = vector.multi_reduction <add>, %6, %cst [1] : vector<8x32xf32> to vector<8xf32>
    %8 = vector.shape_cast %7 : vector<8xf32> to vector<8x1xf32>
    %9 = arith.mulf %3, %3 : vector<8x32xf32>
    %cst_5 = arith.constant dense<0.000000e+00> : vector<8xf32>
    %10 = vector.multi_reduction <add>, %9, %cst_5 [1] : vector<8x32xf32> to vector<8xf32>
    %11 = vector.shape_cast %10 : vector<8xf32> to vector<8x1xf32>
    %12 = arith.mulf %4, %4 : vector<8x32xf32>
    %cst_6 = arith.constant dense<0.000000e+00> : vector<8xf32>
    %13 = vector.multi_reduction <add>, %12, %cst_6 [1] : vector<8x32xf32> to vector<8xf32>
    %14 = vector.shape_cast %13 : vector<8xf32> to vector<8x1xf32>
    %15 = arith.mulf %11, %14 : vector<8x1xf32>
    %cst_7 = arith.constant 9.99999996E-13 : f32
    %16 = vector.broadcast %cst_7 : f32 to vector<8x1xf32>
    %17 = arith.maximumf %15, %16 : vector<8x1xf32>
    %18 = math.rsqrt %17 : vector<8x1xf32>
    %19 = arith.mulf %8, %18 : vector<8x1xf32>
    %cst_8 = arith.constant 1.000000e+00 : f32
    %20 = vector.broadcast %cst_8 : f32 to vector<8x1xf32>
    %21 = arith.addf %19, %20 : vector<8x1xf32>
    %cst_9 = arith.constant 5.000000e-01 : f32
    %22 = vector.broadcast %cst_9 : f32 to vector<8x1xf32>
    %23 = arith.mulf %22, %21 : vector<8x1xf32>
    %cst_10 = arith.constant 2.000000e+00 : f32
    %24 = vector.broadcast %cst_10 : f32 to vector<8x1xf32>
    %25 = arith.mulf %24, %23 : vector<8x1xf32>
    %cst_11 = arith.constant -1.000000e+00 : f32
    %26 = vector.broadcast %cst_11 : f32 to vector<8x1xf32>
    %27 = arith.addf %25, %26 : vector<8x1xf32>
    %28 = arith.subf %27, %5 : vector<8x1xf32>
    %29 = arith.mulf %28, %28 : vector<8x1xf32>
    %30 = tpu.iota {dimensions = array<i32: 0>} : vector<8x1xi32>
    %c8_i32 = arith.constant 8 : i32
    %31 = arith.muli %arg0, %c8_i32 : i32
    %32 = vector.broadcast %31 : i32 to vector<8x1xi32>
    %33 = arith.addi %30, %32 : vector<8x1xi32>
    %c4_i32 = arith.constant 4 : i32
    %34 = vector.broadcast %c4_i32 : i32 to vector<8x1xi32>
    %35 = arith.cmpi slt, %33, %34 : vector<8x1xi32>
    %cst_12 = arith.constant 0.000000e+00 : f32
    %36 = vector.broadcast %cst_12 : f32 to vector<8x1xf32>
    %37 = arith.select %35, %29, %36 : vector<8x1xi1>, vector<8x1xf32>
    %c0_13 = arith.constant 0 : index
    %c0_14 = arith.constant 0 : index
    %38 = memref.load %arg3[%c0_13, %c0_14] : memref<1x1xf32, #tpu.memory_space<smem>>
    %39 = vector.shape_cast %37 : vector<8x1xf32> to vector<1x8x1xf32>
    %cst_15 = arith.constant dense<0.000000e+00> : vector<1xf32>
    %40 = vector.multi_reduction <add>, %39, %cst_15 [1, 2] : vector<1x8x1xf32> to vector<1xf32>
    %41 = vector.shape_cast %40 : vector<1xf32> to vector<1x1x1xf32>
    %42 = vector.extract %41[0, 0, 0] : f32 from vector<1x1x1xf32>
    %43 = arith.addf %38, %42 : f32
    %c0_16 = arith.constant 0 : index
    %c0_17 = arith.constant 0 : index
    %44 = memref.load %arg3[%c0_16, %c0_17] : memref<1x1xf32, #tpu.memory_space<smem>>
    memref.store %43, %arg3[%c0_16, %c0_17] : memref<1x1xf32, #tpu.memory_space<smem>>
    %c0_i32_18 = arith.constant 0 : i32
    %45 = arith.cmpi eq, %arg0, %c0_i32_18 : i32
    %46 = arith.extui %45 : i1 to i32
    %c0_i32_19 = arith.constant 0 : i32
    %47 = arith.cmpi ne, %46, %c0_i32_19 : i32
    scf.if %47 {
      %c0_20 = arith.constant 0 : index
      %c0_21 = arith.constant 0 : index
      %48 = memref.load %arg3[%c0_20, %c0_21] : memref<1x1xf32, #tpu.memory_space<smem>>
      %cst_22 = arith.constant 2.500000e-01 : f32
      %49 = arith.mulf %48, %cst_22 : f32
      %c0_23 = arith.constant 0 : index
      %c0_24 = arith.constant 0 : index
      %50 = memref.load %arg3[%c0_23, %c0_24] : memref<1x1xf32, #tpu.memory_space<smem>>
      memref.store %49, %arg3[%c0_23, %c0_24] : memref<1x1xf32, #tpu.memory_space<smem>>
    } else {
    }
    return
  }
  func.func @transform_0(%arg0: i32) -> (i32, i32) {
    %c0_i32 = arith.constant 0 : i32
    %c0_i32_0 = arith.constant 0 : i32
    return %arg0, %c0_i32 : i32, i32
  }
  func.func @transform_1(%arg0: i32) -> (i32, i32) {
    %c0_i32 = arith.constant 0 : i32
    %c0_i32_0 = arith.constant 0 : i32
    return %arg0, %c0_i32 : i32, i32
  }
  func.func @transform_2(%arg0: i32) -> (i32, i32) {
    %c0_i32 = arith.constant 0 : i32
    %c0_i32_0 = arith.constant 0 : i32
    %c0_i32_1 = arith.constant 0 : i32
    return %c0_i32, %c0_i32_0 : i32, i32
  }
}

</mosaic_0001>

<llo_original>
// kernel: tpu_custom_call.1
$region0: #{tpu_custom_call.1}
  #allocation0 [shape = 'u32[]', space=smem, size = 0x4, offset = 0x4, fixed_abs, tag = 'smem constant byte address 0x4 - core index']
  #allocation1 [shape = 'u32[144,128]{1,0:T(1,128)}', space=vmem, size = 0x12000, scoped, tag = 'internal scratch']
  %s0 = inlined_call_operand.vmem [shape: f32[4,64], index: 0, kind: input, shape index: {}]
  %s1 = inlined_call_operand.vmem [shape: f32[4,1], index: 1, kind: input, shape index: {}]
  %s2 = inlined_call_operand.hbm [shape: f32[1,1], index: 2, kind: output, shape index: {}]
  %s3 = sld [smem:[#allocation0]]
  $region26: #{tpu_custom_call.1} parent=0
    _
  %s5 = ssub.s32 1, %s3
  %s6 = scalar_select 0, %s5, %s3
  $region1: #{tpu_custom_call.1} parent=0
    #allocation2 [shape = 'u8[512]{0}', space=smem, size = 0x200, scoped, tag = 'output window, operand 0, single buffered']
    #allocation3 [shape = 's32[1]{0}', space=sflag, size = 0x4, scoped, tag = 'scoped memory for tpu_custom_call.1']
    %7 = vsyncpa [#allocation3], 0
    // Predicated region
    $region2: #{tpu_custom_call.1} parent=1 // pred_check
      _
    $region3: #{tpu_custom_call.1} parent=1 // pred_check_branch
      %9 = sbr.rel (0) target = $region5
    $region4: #{tpu_custom_call.1} parent=1 // pred_region
      _
    $region5: #{tpu_custom_call.1} parent=1 // pred_fallthru
      _
    // Predicated region
    $region6: #{tpu_custom_call.1} parent=1 // pred_check
      _
    $region7: #{tpu_custom_call.1} parent=1 // pred_check_branch
      %11 = sbr.rel (0) target = $region9
    $region8: #{tpu_custom_call.1} parent=1 // pred_region
      _
    $region9: #{tpu_custom_call.1} parent=1 // pred_fallthru
      _
    %p12 = scmp.eq.s32.totalorder 0, 0
    // Predicated region
    $region10: #{tpu_custom_call.1} parent=1 // pred_check
      %p13 = pneg %p12
    $region11: #{tpu_custom_call.1} parent=1 // pred_check_branch
      %15 = sbr.rel (%p13) target = $region13
    $region12: #{tpu_custom_call.1} parent=1 // pred_region
      %s16 = scalar_lea.smem [#allocation2], 0
      %17 = sst [smem:[%s16]] 0.0
    $region13: #{tpu_custom_call.1} parent=1 // pred_fallthru
      _
    %v18 = vld [vmem:[%s0] sm:$0xff]
    %v19 = vld [vmem:[%s1] sm:$0xff]
    %21 = vrot.lane.b32.xlu0 %v18, 96
    %v22 = vpop.permute.xlu0 %21
    %v24 = vmul.f32 %v18, %v22
    %vm25 = vcmask 261120
    %v26 = vsel %vm25, %v24, 0.0
    %27 = vadd.xlane.f32.xlu0 %v26
    %v28 = vpop.xlane.xlu0 %27
    %v29 = vmul.f32 %v18, %v18
    %v30 = vsel %vm25, %v29, 0.0
    %31 = vadd.xlane.f32.xlu0 %v30
    %v32 = vpop.xlane.xlu0 %31
    %34 = vrot.lane.b32.xlu0 %v29, 96
    %v35 = vpop.permute.xlu0 %34
    %v37 = vsel %vm25, %v35, 0.0
    %38 = vadd.xlane.f32.xlu0 %v37
    %v39 = vpop.xlane.xlu0 %38
    %v40 = vmul.f32 %v32, %v39
    %v41 = vmax.f32 %v40, 1e-12
    %v42 = vrsqrt.pop %v41
    %v43 = vmul.f32 %v28, %v42
    %v44 = vadd.f32 %v43, 1.0
    %v45 = vmul.f32 %v44, 0.5
    %v46 = vmul.f32 %v45, 2.0
    %v47 = vadd.f32 %v46, -1.0
    %v48 = vsub.f32 %v47, %v19
    %v49 = vmul.f32 %v48, %v48
    %v50 = vlaneseq
    %v51 = vshrl.u32 %v50, 7
    %s52 = smul.u32 0, 8
    %v53 = vstv %s52
    %v54 = vadd.s32 %v51, %v53
    %vm55 = vcmp.lt.s32.totalorder %v54, 4
    %v56 = vsel %vm55, %v49, 0.0
    %s57 = sld [smem:[#allocation2]]
    %vm58 = vcmask 7168
    %v59 = vsel %vm58, %v56, 0.0
    %60 = vadd.xlane.f32.xlu0 %v59
    %v61 = vpop.xlane.xlu0 %60
    %v62 = vrot.slane %v61, 4
    %v63 = vadd.f32 %v61, %v62
    %v64 = vrot.slane %v63, 2
    %v65 = vadd.f32 %v63, %v64
    %v66 = vrot.slane %v65, 1
    %v67 = vadd.f32 %v65, %v66
    %s68 = vtos %v67
    %s69 = sadd.f32 %s57, %s68
    %s70 = scalar_lea.smem [#allocation2], 0
    %71 = sst [smem:[%s70]] %s69
    // Predicated region
    $region14: #{tpu_custom_call.1} parent=1 // pred_check
      %p72 = pneg %p12
    $region15: #{tpu_custom_call.1} parent=1 // pred_check_branch
      %74 = sbr.rel (%p72) target = $region17
    $region16: #{tpu_custom_call.1} parent=1 // pred_region
      %s75 = sld [smem:[#allocation2]]
      %s76 = smul.f32 %s75, 0.25
      %77 = sst [smem:[%s70]] %s76
    $region17: #{tpu_custom_call.1} parent=1 // pred_fallthru
      _
    // Predicated region
    $region18: #{tpu_custom_call.1} parent=1 // pred_check
      _
    $region19: #{tpu_custom_call.1} parent=1 // pred_check_branch
      %79 = sbr.rel (0) target = $region21
    $region20: #{tpu_custom_call.1} parent=1 // pred_region
      %s81 = ssub.s32 16, 16
      %82 = vsyncadd [#allocation3], %s81
      %85 = dma.smem_to_hbm [#allocation2], 16, %s2, [#allocation3]
    $region21: #{tpu_custom_call.1} parent=1 // pred_fallthru
      _
    // Predicated region
    $region22: #{tpu_custom_call.1} parent=1 // pred_check
      _
    $region23: #{tpu_custom_call.1} parent=1 // pred_check_branch
      %87 = sbr.rel (0) target = $region25
    $region24: #{tpu_custom_call.1} parent=1 // pred_region
      %88 = dma.done [#allocation3], 16
    $region25: #{tpu_custom_call.1} parent=1 // pred_fallthru
      _
    %89 = sfence
    %90 = vsyncpa [#allocation3], 1

</llo_original>
